<compile_context>
chip_gen: v7x
topology: tpu7x:2x2x1
jax: 0.10.0
libtpu: 0.0.40
codegen_flags: <defaults>
</compile_context>

<pallas_src>
import functools

import jax
import jax.numpy as jnp
from jax import lax
from jax.experimental import pallas as pl
from jax.experimental.pallas import tpu as pltpu


def _round_up(x, m):
    return ((x + m - 1) // m) * m


def _lm_head_kernel(x_ref, w1_ref, b1_ref, gamma_ref, beta_ref, w2_ref, b2_ref,
                    o_ref, hn_ref, *, eps, h_real):
    # ---- dense + LayerNorm: only on the first vocab step of each token tile ----
    @pl.when(pl.program_id(1) == 0)
    def _():
        h = jnp.dot(x_ref[...], w1_ref[...],
                    preferred_element_type=jnp.float32)
        h = h + b1_ref[...].astype(jnp.float32)            # (tn, Hp) + (1, Hp)
        # Single reduction pass: sum and sum-of-squares together.  Padded
        # columns of h are exactly zero by construction, so dividing by the
        # real hidden size gives the exact (unpadded) statistics.
        inv_h = 1.0 / h_real
        s = jnp.sum(h, axis=-1, keepdims=True)
        ss = jnp.sum(h * h, axis=-1, keepdims=True)
        mean = s * inv_h
        var = jnp.maximum(ss * inv_h - mean * mean, 0.0)
        hn = (h - mean) * lax.rsqrt(var + eps)
        hn = hn * gamma_ref[...].astype(jnp.float32) \
             + beta_ref[...].astype(jnp.float32)
        hn_ref[...] = hn.astype(hn_ref.dtype)

    # ---- decoder: cached hn @ W2 vocab-tile + bias tile ----
    out = jnp.dot(hn_ref[...], w2_ref[...], preferred_element_type=jnp.float32)
    out = out + b2_ref[...].astype(jnp.float32)            # (tn, tv) + (1, tv)
    o_ref[...] = out.astype(o_ref.dtype)


def prepare_lm_head_params(params, *, vocab_tile=2048, compute_dtype=None):
    """One-time parameter prep (do NOT call per forward): transpose PyTorch
    (out, in) weights to (in, out), pad lane dims to multiples of 128 (vocab to
    a multiple of the vocab tile), reshape biases/affine params to (1, dim)."""
    w1 = jnp.asarray(params["dense_w"])      # (H, H)  torch layout (out, in)
    w2 = jnp.asarray(params["decoder_w"])    # (V, H)
    H = w1.shape[1]
    V = w2.shape[0]
    if compute_dtype is None:
        compute_dtype = w1.dtype             # keep native dtype for the MXU

    Hp = _round_up(H, 128)
    tv = vocab_tile if V >= vocab_tile else _round_up(V, 128)
    Vp = _round_up(V, tv)

    def pad2(a, rows, cols):
        return jnp.pad(a, ((0, rows - a.shape[0]), (0, cols - a.shape[1])))

    return {
        "w1_t": pad2(w1.T.astype(compute_dtype), Hp, Hp),           # (Hp, Hp)
        "b1": pad2(jnp.asarray(params["dense_b"]).reshape(1, H), 1, Hp),
        "gamma": pad2(jnp.asarray(params["ln_gamma"]).reshape(1, H), 1, Hp),
        "beta": pad2(jnp.asarray(params["ln_beta"]).reshape(1, H), 1, Hp),
        "w2_t": pad2(w2.T.astype(compute_dtype), Hp, Vp),           # (Hp, Vp)
        "b2": pad2(jnp.asarray(params["decoder_b"]).reshape(1, V), 1, Vp),
        "H": H, "V": V, "Hp": Hp, "Vp": Vp, "tv": tv,
        "compute_dtype": compute_dtype,
    }


def lm_prediction_head(hidden_states, prep, *, eps=1e-12, token_tile=256):
    """hidden_states: (B, S, H) -> logits (B, S, V)."""
    B, S, H = hidden_states.shape
    assert H == prep["H"], "hidden size mismatch with prepared params"
    N = B * S
    Hp, Vp, V, tv = prep["Hp"], prep["Vp"], prep["V"], prep["tv"]
    cdt = prep["compute_dtype"]

    # Token tile: MXU-row sized for real workloads, sublane-aligned for small N.
    tn = token_tile if N >= token_tile else _round_up(N, 16)
    Np = _round_up(N, tn)

    x = hidden_states.reshape(N, H)
    x = jnp.pad(x, ((0, Np - N), (0, Hp - H)))

    kernel = functools.partial(_lm_head_kernel, eps=eps, h_real=float(H))

    # Explicit VMEM budget (double-buffered tiles + scratch), capped at the
    # v7x physical 64 MiB so an oversized tile choice fails loudly.
    def _ib(dt):
        return jnp.dtype(dt).itemsize
    est = (2 * tn * Hp * _ib(x.dtype)                  # x tiles
           + 2 * Hp * Hp * _ib(cdt)                    # dense weight
           + 2 * Hp * tv * _ib(cdt)                    # decoder weight tiles
           + 2 * tn * tv * _ib(hidden_states.dtype)    # output tiles
           + tn * Hp * _ib(cdt)                        # hn scratch
           + 8 * Hp * 4 + 4 * tv * 4)                  # biases / affine params
    vmem_limit = int(min(max(int(est * 1.25), 32 << 20), 64 << 20))

    out = pl.pallas_call(
        kernel,
        out_shape=jax.ShapeDtypeStruct((Np, Vp), hidden_states.dtype),
        grid_spec=pltpu.PrefetchScalarGridSpec(
            num_scalar_prefetch=0,
            grid=(Np // tn, Vp // tv),                 # vocab axis innermost
            in_specs=[
                pl.BlockSpec((tn, Hp), lambda i, j: (i, 0)),   # x token tile
                pl.BlockSpec((Hp, Hp), lambda i, j: (0, 0)),   # dense W^T
                pl.BlockSpec((1, Hp), lambda i, j: (0, 0)),    # dense bias
                pl.BlockSpec((1, Hp), lambda i, j: (0, 0)),    # LN gamma
                pl.BlockSpec((1, Hp), lambda i, j: (0, 0)),    # LN beta
                pl.BlockSpec((Hp, tv), lambda i, j: (0, j)),   # decoder W^T tile
                pl.BlockSpec((1, tv), lambda i, j: (0, j)),    # decoder bias tile
            ],
            out_specs=pl.BlockSpec((tn, tv), lambda i, j: (i, j)),
            scratch_shapes=[pltpu.VMEM((tn, Hp), cdt)],        # cached LN output
        ),
        compiler_params=pltpu.CompilerParams(
            dimension_semantics=("parallel", "arbitrary"),
            vmem_limit_bytes=vmem_limit),
    )(x, prep["w1_t"], prep["b1"], prep["gamma"], prep["beta"],
      prep["w2_t"], prep["b2"])

    return out[:N, :V].reshape(B, S, V)


def _reference(hidden_states, params, eps):
    """Pure-JAX reference matching the PyTorch forward exactly."""
    x = hidden_states.astype(jnp.float32)
    h = x @ params["dense_w"].T.astype(jnp.float32) + params["dense_b"]
    mean = jnp.mean(h, axis=-1, keepdims=True)
    var = jnp.mean((h - mean) ** 2, axis=-1, keepdims=True)
    h = (h - mean) * lax.rsqrt(var + eps)
    h = h * params["ln_gamma"] + params["ln_beta"]
    out = h @ params["decoder_w"].T.astype(jnp.float32) + params["decoder_b"]
    return out.astype(hidden_states.dtype)


if __name__ == "__main__":
    # Small config consistent with the module: hidden_size=32, vocab_size=64.
    B, S, H, V = 2, 8, 32, 64
    eps = 1e-12

    key = jax.random.PRNGKey(0)
    k_x, k_w1, k_b1, k_g, k_bta, k_w2 = jax.random.split(key, 6)

    hidden_states = jax.random.normal(k_x, (B, S, H), dtype=jnp.float32)

    params = {
        # nn.Linear(H, H): weight (out, in), bias (out,)
        "dense_w": jax.random.normal(k_w1, (H, H), dtype=jnp.float32) * 0.02,
        "dense_b": jax.random.normal(k_b1, (H,), dtype=jnp.float32) * 0.02,
        # nn.LayerNorm(H): deterministic non-trivial affine params
        "ln_gamma": 1.0 + 0.01 * jax.random.normal(k_g, (H,), dtype=jnp.float32),
        "ln_beta": 0.01 * jax.random.normal(k_bta, (H,), dtype=jnp.float32),
        # nn.Linear(H, V, bias=False) + separate bias Parameter (zeros in __init__)
        "decoder_w": jax.random.normal(k_w2, (V, H), dtype=jnp.float32) * 0.02,
        "decoder_b": jnp.zeros((V,), dtype=jnp.float32),
    }

    # One-time parameter preparation (transpose + lane padding), reused per call.
    prep = prepare_lm_head_params(params, vocab_tile=2048)

    out = lm_prediction_head(hidden_states, prep, eps=eps)
    out = jax.block_until_ready(out)

    ref = _reference(hidden_states, params, eps)
    assert out.shape == (B, S, V)
    assert jnp.allclose(out, ref, atol=1e-4, rtol=1e-4), "mismatch vs reference"

    print("KERNEL_OK")
</pallas_src>

<mosaic_0001>
module attributes {stable_mosaic.version = 11 : i64} {
  func.func @_lm_head_kernel(%arg0: i32, %arg1: i32, %arg2: memref<16x128xf32, #tpu.memory_space<vmem>>, %arg3: memref<128x128xf32, #tpu.memory_space<vmem>>, %arg4: memref<1x128xf32, #tpu.memory_space<vmem>>, %arg5: memref<1x128xf32, #tpu.memory_space<vmem>>, %arg6: memref<1x128xf32, #tpu.memory_space<vmem>>, %arg7: memref<128x128xf32, #tpu.memory_space<vmem>>, %arg8: memref<1x128xf32, #tpu.memory_space<vmem>>, %arg9: memref<16x128xf32, #tpu.memory_space<vmem>>, %arg10: memref<16x128xf32, #tpu.memory_space<vmem>>) attributes {dimension_semantics = [#tpu.dimension_semantics<parallel>, #tpu.dimension_semantics<arbitrary>], iteration_bounds = array<i64: 1, 1>, scalar_prefetch = 0 : i64, scratch_operands = 1 : i64, tpu.core_type = #tpu.core_type<tc>, window_params = [{transform_indices = @transform_0, window_bounds = array<i64: 16, 128>}, {pipeline_mode = #tpu.pipeline_mode<synchronous>, transform_indices = @transform_1, window_bounds = array<i64: 128, 128>}, {pipeline_mode = #tpu.pipeline_mode<synchronous>, transform_indices = @transform_2, window_bounds = array<i64: 1, 128>}, {pipeline_mode = #tpu.pipeline_mode<synchronous>, transform_indices = @transform_3, window_bounds = array<i64: 1, 128>}, {pipeline_mode = #tpu.pipeline_mode<synchronous>, transform_indices = @transform_4, window_bounds = array<i64: 1, 128>}, {transform_indices = @transform_5, window_bounds = array<i64: 128, 128>}, {transform_indices = @transform_6, window_bounds = array<i64: 1, 128>}, {transform_indices = @transform_7, window_bounds = array<i64: 16, 128>}]} {
    %c0_i32 = arith.constant 0 : i32
    %0 = arith.cmpi eq, %arg1, %c0_i32 : i32
    %1 = arith.extui %0 : i1 to i32
    %c0_i32_0 = arith.constant 0 : i32
    %2 = arith.cmpi ne, %1, %c0_i32_0 : i32
    scf.if %2 {
      %c0_8 = arith.constant 0 : index
      %c0_9 = arith.constant 0 : index
      %10 = vector.load %arg2[%c0_8, %c0_9] : memref<16x128xf32, #tpu.memory_space<vmem>>, vector<16x128xf32>
      %c0_10 = arith.constant 0 : index
      %c0_11 = arith.constant 0 : index
      %11 = vector.load %arg3[%c0_10, %c0_11] : memref<128x128xf32, #tpu.memory_space<vmem>>, vector<128x128xf32>
      %cst_12 = arith.constant dense<0.000000e+00> : vector<16x128xf32>
      %12 = tpu.matmul %10, %11, %cst_12 {dimension_numbers = #tpu.dot_dimension_numbers<[1], [0], [0], [1], [0, 0, 1, 1], [], []>} : vector<16x128xf32>, vector<128x128xf32>, vector<16x128xf32> -> vector<16x128xf32>
      %c0_13 = arith.constant 0 : index
      %c0_14 = arith.constant 0 : index
      %13 = vector.load %arg4[%c0_13, %c0_14] : memref<1x128xf32, #tpu.memory_space<vmem>>, vector<1x128xf32>
      %14 = vector.broadcast %13 : vector<1x128xf32> to vector<16x128xf32>
      %15 = arith.addf %12, %14 : vector<16x128xf32>
      %cst_15 = arith.constant dense<0.000000e+00> : vector<16xf32>
      %16 = vector.multi_reduction <add>, %15, %cst_15 [1] : vector<16x128xf32> to vector<16xf32>
      %17 = vector.shape_cast %16 : vector<16xf32> to vector<16x1xf32>
      %18 = arith.mulf %15, %15 : vector<16x128xf32>
      %cst_16 = arith.constant dense<0.000000e+00> : vector<16xf32>
      %19 = vector.multi_reduction <add>, %18, %cst_16 [1] : vector<16x128xf32> to vector<16xf32>
      %20 = vector.shape_cast %19 : vector<16xf32> to vector<16x1xf32>
      %cst_17 = arith.constant 3.125000e-02 : f32
      %21 = vector.broadcast %cst_17 : f32 to vector<16x1xf32>
      %22 = arith.mulf %17, %21 : vector<16x1xf32>
      %cst_18 = arith.constant 3.125000e-02 : f32
      %23 = vector.broadcast %cst_18 : f32 to vector<16x1xf32>
      %24 = arith.mulf %20, %23 : vector<16x1xf32>
      %25 = arith.mulf %22, %22 : vector<16x1xf32>
      %26 = arith.subf %24, %25 : vector<16x1xf32>
      %cst_19 = arith.constant 0.000000e+00 : f32
      %27 = vector.broadcast %cst_19 : f32 to vector<16x1xf32>
      %28 = arith.maximumf %26, %27 : vector<16x1xf32>
      %29 = vector.broadcast %22 : vector<16x1xf32> to vector<16x128xf32>
      %30 = arith.subf %15, %29 : vector<16x128xf32>
      %cst_20 = arith.constant 9.99999996E-13 : f32
      %31 = vector.broadcast %cst_20 : f32 to vector<16x1xf32>
      %32 = arith.addf %28, %31 : vector<16x1xf32>
      %33 = math.rsqrt %32 : vector<16x1xf32>
      %34 = vector.broadcast %33 : vector<16x1xf32> to vector<16x128xf32>
      %35 = arith.mulf %30, %34 : vector<16x128xf32>
      %c0_21 = arith.constant 0 : index
      %c0_22 = arith.constant 0 : index
      %36 = vector.load %arg5[%c0_21, %c0_22] : memref<1x128xf32, #tpu.memory_space<vmem>>, vector<1x128xf32>
      %37 = vector.broadcast %36 : vector<1x128xf32> to vector<16x128xf32>
      %38 = arith.mulf %35, %37 : vector<16x128xf32>
      %c0_23 = arith.constant 0 : index
      %c0_24 = arith.constant 0 : index
      %39 = vector.load %arg6[%c0_23, %c0_24] : memref<1x128xf32, #tpu.memory_space<vmem>>, vector<1x128xf32>
      %40 = vector.broadcast %39 : vector<1x128xf32> to vector<16x128xf32>
      %41 = arith.addf %38, %40 : vector<16x128xf32>
      %c0_25 = arith.constant 0 : index
      %c0_26 = arith.constant 0 : index
      %42 = vector.load %arg10[%c0_25, %c0_26] : memref<16x128xf32, #tpu.memory_space<vmem>>, vector<16x128xf32>
      tpu.vector_store %arg10[%c0_25, %c0_26], %41 {strides = array<i32>} : memref<16x128xf32, #tpu.memory_space<vmem>>, vector<16x128xf32>,
    } else {
    }
    %c0 = arith.constant 0 : index
    %c0_1 = arith.constant 0 : index
    %3 = vector.load %arg10[%c0, %c0_1] : memref<16x128xf32, #tpu.memory_space<vmem>>, vector<16x128xf32>
    %c0_2 = arith.constant 0 : index
    %c0_3 = arith.constant 0 : index
    %4 = vector.load %arg7[%c0_2, %c0_3] : memref<128x128xf32, #tpu.memory_space<vmem>>, vector<128x128xf32>
    %cst = arith.constant dense<0.000000e+00> : vector<16x128xf32>
    %5 = tpu.matmul %3, %4, %cst {dimension_numbers = #tpu.dot_dimension_numbers<[1], [0], [0], [1], [0, 0, 1, 1], [], []>} : vector<16x128xf32>, vector<128x128xf32>, vector<16x128xf32> -> vector<16x128xf32>
    %c0_4 = arith.constant 0 : index
    %c0_5 = arith.constant 0 : index
    %6 = vector.load %arg8[%c0_4, %c0_5] : memref<1x128xf32, #tpu.memory_space<vmem>>, vector<1x128xf32>
    %7 = vector.broadcast %6 : vector<1x128xf32> to vector<16x128xf32>
    %8 = arith.addf %5, %7 : vector<16x128xf32>
    %c0_6 = arith.constant 0 : index
    %c0_7 = arith.constant 0 : index
    %9 = vector.load %arg9[%c0_6, %c0_7] : memref<16x128xf32, #tpu.memory_space<vmem>>, vector<16x128xf32>
    tpu.vector_store %arg9[%c0_6, %c0_7], %8 {strides = array<i32>} : memref<16x128xf32, #tpu.memory_space<vmem>>, vector<16x128xf32>,
    return
  }
  func.func @transform_0(%arg0: i32, %arg1: i32) -> (i32, i32) {
    %c0_i32 = arith.constant 0 : i32
    %c0_i32_0 = arith.constant 0 : i32
    return %arg0, %c0_i32 : i32, i32
  }
  func.func @transform_1(%arg0: i32, %arg1: i32) -> (i32, i32) {
    %c0_i32 = arith.constant 0 : i32
    %c0_i32_0 = arith.constant 0 : i32
    %c0_i32_1 = arith.constant 0 : i32
    return %c0_i32, %c0_i32_0 : i32, i32
  }
  func.func @transform_2(%arg0: i32, %arg1: i32) -> (i32, i32) {
    %c0_i32 = arith.constant 0 : i32
    %c0_i32_0 = arith.constant 0 : i32
    %c0_i32_1 = arith.constant 0 : i32
    return %c0_i32, %c0_i32_0 : i32, i32
  }
  func.func @transform_3(%arg0: i32, %arg1: i32) -> (i32, i32) {
    %c0_i32 = arith.constant 0 : i32
    %c0_i32_0 = arith.constant 0 : i32
    %c0_i32_1 = arith.constant 0 : i32
    return %c0_i32, %c0_i32_0 : i32, i32
  }
  func.func @transform_4(%arg0: i32, %arg1: i32) -> (i32, i32) {
    %c0_i32 = arith.constant 0 : i32
    %c0_i32_0 = arith.constant 0 : i32
    %c0_i32_1 = arith.constant 0 : i32
    return %c0_i32, %c0_i32_0 : i32, i32
  }
  func.func @transform_5(%arg0: i32, %arg1: i32) -> (i32, i32) {
    %c0_i32 = arith.constant 0 : i32
    %c0_i32_0 = arith.constant 0 : i32
    return %c0_i32, %arg1 : i32, i32
  }
  func.func @transform_6(%arg0: i32, %arg1: i32) -> (i32, i32) {
    %c0_i32 = arith.constant 0 : i32
    %c0_i32_0 = arith.constant 0 : i32
    return %c0_i32, %arg1 : i32, i32
  }
  func.func @transform_7(%arg0: i32, %arg1: i32) -> (i32, i32) {
    %c0_i32 = arith.constant 0 : i32
    return %arg0, %arg1 : i32, i32
  }
}

</mosaic_0001>

<llo_original>
// kernel: tpu_custom_call.1
$region0: #{tpu_custom_call.1}
  #allocation0 [shape = 'u32[]', space=smem, size = 0x4, offset = 0x4, fixed_abs, tag = 'smem constant byte address 0x4 - core index']
  #allocation1 [shape = 'u32[144,128]{1,0:T(1,128)}', space=vmem, size = 0x12000, scoped, tag = 'internal scratch']
  #allocation2 [shape = 'f32[16,128]{1,0:T(8,128)}', space=vmem, size = 0x2000, scoped, tag = 'scratch operand']
  %s0 = inlined_call_operand.hbm [shape: f32[16,128], index: 0, kind: input, shape index: {}]
  %s1 = inlined_call_operand.hbm [shape: f32[128,128], index: 1, kind: input, shape index: {}]
  %s2 = inlined_call_operand.vmem [shape: f32[1,128], index: 2, kind: input, shape index: {}]
  %s3 = inlined_call_operand.vmem [shape: f32[1,128], index: 3, kind: input, shape index: {}]
  %s4 = inlined_call_operand.vmem [shape: f32[1,128], index: 4, kind: input, shape index: {}]
  %s5 = inlined_call_operand.hbm [shape: f32[128,128], index: 5, kind: input, shape index: {}]
  %s6 = inlined_call_operand.vmem [shape: f32[1,128], index: 6, kind: input, shape index: {}]
  %s7 = inlined_call_operand.hbm [shape: f32[16,128], index: 7, kind: output, shape index: {}]
  %s8 = sld [smem:[#allocation0]]
  $region54: #{tpu_custom_call.1} parent=0
    _
  %s10 = ssub.s32 1, %s8
  %s11 = scalar_select 0, %s10, %s8
  $region1: #{tpu_custom_call.1} parent=0
    #allocation3 [shape = 'u8[8192]{0}', space=vmem, size = 0x2000, scoped, tag = 'input window, operand 0, single buffered']
    #allocation4 [shape = 's32[1]{0}', space=sflag, size = 0x4, scoped, tag = 'scoped memory for tpu_custom_call.1']
    #allocation5 [shape = 's32[1]{0}', space=sflag, size = 0x4, scoped, tag = 'scoped memory for tpu_custom_call.1']
    #allocation6 [shape = 'u8[65536]{0}', space=vmem, size = 0x10000, scoped, tag = 'input window, operand 1, single buffered']
    #allocation7 [shape = 's32[1]{0}', space=sflag, size = 0x4, scoped, tag = 'scoped memory for tpu_custom_call.1']
    #allocation8 [shape = 'u8[65536]{0}', space=vmem, size = 0x10000, scoped, tag = 'input window, operand 5, single buffered']
    #allocation9 [shape = 'u8[8192]{0}', space=vmem, size = 0x2000, scoped, tag = 'output window, operand 0, single buffered']
    %12 = vsyncpa [#allocation4], 0
    %13 = vsyncpa [#allocation7], 0
    %14 = vsyncpa [#allocation5], 0
    // Predicated region
    $region2: #{tpu_custom_call.1} parent=1 // pred_check
      _
    $region3: #{tpu_custom_call.1} parent=1 // pred_check_branch
      %16 = sbr.rel (0) target = $region5
    $region4: #{tpu_custom_call.1} parent=1 // pred_region
      %s18 = ssub.s32 256, 256
      %19 = vsyncadd [#allocation4], %s18
      %s20 = sshll.u32 [#allocation3], 4
      %s21 = int_to_ptr.vmem [resolvable:$true] %s20
      %26 = dma.hbm_to_vmem [thread:$0]  %s0, 256, %s21, [#allocation4], 128, 128, 8
    $region5: #{tpu_custom_call.1} parent=1 // pred_fallthru
      _
    // Predicated region
    $region6: #{tpu_custom_call.1} parent=1 // pred_check
      _
    $region7: #{tpu_custom_call.1} parent=1 // pred_check_branch
      %28 = sbr.rel (0) target = $region9
    $region8: #{tpu_custom_call.1} parent=1 // pred_region
      %s30 = ssub.s32 2048, 2048
      %31 = vsyncadd [#allocation7], %s30
      %s32 = sshll.u32 [#allocation6], 4
      %s33 = int_to_ptr.vmem [resolvable:$true] %s32
      %38 = dma.hbm_to_vmem [thread:$0]  %s1, 2048, %s33, [#allocation7], 128, 128, 8
    $region9: #{tpu_custom_call.1} parent=1 // pred_fallthru
      _
    // Predicated region
    $region10: #{tpu_custom_call.1} parent=1 // pred_check
      _
    $region11: #{tpu_custom_call.1} parent=1 // pred_check_branch
      %40 = sbr.rel (0) target = $region13
    $region12: #{tpu_custom_call.1} parent=1 // pred_region
      _
    $region13: #{tpu_custom_call.1} parent=1 // pred_fallthru
      _
    // Predicated region
    $region14: #{tpu_custom_call.1} parent=1 // pred_check
      _
    $region15: #{tpu_custom_call.1} parent=1 // pred_check_branch
      %42 = sbr.rel (0) target = $region17
    $region16: #{tpu_custom_call.1} parent=1 // pred_region
      _
    $region17: #{tpu_custom_call.1} parent=1 // pred_fallthru
      _
    // Predicated region
    $region18: #{tpu_custom_call.1} parent=1 // pred_check
      _
    $region19: #{tpu_custom_call.1} parent=1 // pred_check_branch
      %44 = sbr.rel (0) target = $region21
    $region20: #{tpu_custom_call.1} parent=1 // pred_region
      _
    $region21: #{tpu_custom_call.1} parent=1 // pred_fallthru
      _
    // Predicated region
    $region22: #{tpu_custom_call.1} parent=1 // pred_check
      _
    $region23: #{tpu_custom_call.1} parent=1 // pred_check_branch
      %46 = sbr.rel (0) target = $region25
    $region24: #{tpu_custom_call.1} parent=1 // pred_region
      %s48 = ssub.s32 2048, 2048
      %49 = vsyncadd [#allocation7], %s48
      %s50 = sshll.u32 [#allocation8], 4
      %s51 = int_to_ptr.vmem [resolvable:$true] %s50
      %56 = dma.hbm_to_vmem [thread:$0]  %s5, 2048, %s51, [#allocation7], 128, 128, 8
    $region25: #{tpu_custom_call.1} parent=1 // pred_fallthru
      _
    // Predicated region
    $region26: #{tpu_custom_call.1} parent=1 // pred_check
      _
    $region27: #{tpu_custom_call.1} parent=1 // pred_check_branch
      %58 = sbr.rel (0) target = $region29
    $region28: #{tpu_custom_call.1} parent=1 // pred_region
      _
    $region29: #{tpu_custom_call.1} parent=1 // pred_fallthru
      _
    // Predicated region
    $region30: #{tpu_custom_call.1} parent=1 // pred_check
      _
    $region31: #{tpu_custom_call.1} parent=1 // pred_check_branch
      %60 = sbr.rel (0) target = $region33
    $region32: #{tpu_custom_call.1} parent=1 // pred_region
      %61 = dma.done [#allocation4], 256
    $region33: #{tpu_custom_call.1} parent=1 // pred_fallthru
      _
    // Predicated region
    $region34: #{tpu_custom_call.1} parent=1 // pred_check
      _
    $region35: #{tpu_custom_call.1} parent=1 // pred_check_branch
      %63 = sbr.rel (0) target = $region37
    $region36: #{tpu_custom_call.1} parent=1 // pred_region
      %64 = dma.done [#allocation7], 2048
    $region37: #{tpu_custom_call.1} parent=1 // pred_fallthru
      _
    // Predicated region
    $region38: #{tpu_custom_call.1} parent=1 // pred_check
      _
    $region39: #{tpu_custom_call.1} parent=1 // pred_check_branch
      %66 = sbr.rel (0) target = $region41
    $region40: #{tpu_custom_call.1} parent=1 // pred_region
      %67 = dma.done [#allocation7], 2048
    $region41: #{tpu_custom_call.1} parent=1 // pred_fallthru
      _
    %p68 = scmp.eq.s32.totalorder 0, 0
    // Predicated region
    $region42: #{tpu_custom_call.1} parent=1 // pred_check
      %p69 = pneg %p68
    $region43: #{tpu_custom_call.1} parent=1 // pred_check_branch
      %71 = sbr.rel (%p69) target = $region45
    $region44: #{tpu_custom_call.1} parent=1 // pred_region
      %v72 = vld [vmem:[#allocation3] sm:$0xff]
      %v73 = vld [vmem:[#allocation3 + $0x8] sm:$0xff]
      %v74 = vld [vmem:[#allocation6] sm:$0xff]
      %v75 = vld [vmem:[#allocation6 + $0x8] sm:$0xff]
      %v76 = vld [vmem:[#allocation6 + $0x10] sm:$0xff]
      %v77 = vld [vmem:[#allocation6 + $0x18] sm:$0xff]
      %v78 = vld [vmem:[#allocation6 + $0x20] sm:$0xff]
      %v79 = vld [vmem:[#allocation6 + $0x28] sm:$0xff]
      %v80 = vld [vmem:[#allocation6 + $0x30] sm:$0xff]
      %v81 = vld [vmem:[#allocation6 + $0x38] sm:$0xff]
      %v82 = vld [vmem:[#allocation6 + $0x40] sm:$0xff]
      %v83 = vld [vmem:[#allocation6 + $0x48] sm:$0xff]
      %v84 = vld [vmem:[#allocation6 + $0x50] sm:$0xff]
      %v85 = vld [vmem:[#allocation6 + $0x58] sm:$0xff]
      %v86 = vld [vmem:[#allocation6 + $0x60] sm:$0xff]
      %v87 = vld [vmem:[#allocation6 + $0x68] sm:$0xff]
      %v88 = vld [vmem:[#allocation6 + $0x70] sm:$0xff]
      %v89 = vld [vmem:[#allocation6 + $0x78] sm:$0xff]
      %v90 = vld [vmem:[%s2] sm:$0x1]
      %v92 = vlaneseq
      %v93 = vshrl.u32 %v92, 7
      %v94 = vsub.s32 0, %v93
      %v95 = vrot.slane %v90, %v94
      %97 = vmatprep.subr.mxu0 0.0
      %98 = vmatpush1.msra.mxu0 %v74
      %99 = vmatprep.subr.mxu0 0.0
      %100 = vmatpush1.msra.mxu0 %v75
      %101 = vmatprep.subr.mxu0 0.0
      %102 = vmatpush1.msra.mxu0 %v76
      %103 = vmatprep.subr.mxu0 0.0
      %104 = vmatpush1.msra.mxu0 %v77
      %105 = vmatprep.subr.mxu0 0.0
      %106 = vmatpush1.msra.mxu0 %v78
      %107 = vmatprep.subr.mxu0 0.0
      %108 = vmatpush1.msra.mxu0 %v79
      %109 = vmatprep.subr.mxu0 0.0
      %110 = vmatpush1.msra.mxu0 %v80
      %111 = vmatprep.subr.mxu0 0.0
      %112 = vmatpush1.msra.mxu0 %v81
      %113 = vmatprep.subr.mxu0 0.0
      %114 = vmatpush1.msra.mxu0 %v82
      %115 = vmatprep.subr.mxu0 0.0
      %116 = vmatpush1.msra.mxu0 %v83
      %117 = vmatprep.subr.mxu0 0.0
      %118 = vmatpush1.msra.mxu0 %v84
      %119 = vmatprep.subr.mxu0 0.0
      %120 = vmatpush1.msra.mxu0 %v85
      %121 = vmatprep.subr.mxu0 0.0
      %122 = vmatpush1.msra.mxu0 %v86
      %123 = vmatprep.subr.mxu0 0.0
      %124 = vmatpush1.msra.mxu0 %v87
      %125 = vmatprep.subr.mxu0 0.0
      %126 = vmatpush1.msra.mxu0 %v88
      %127 = vmatprep.subr.mxu0 0.0
      %128 = vmatpush1.msra.mxu0 %v89
      %129 = vmatprep.subr.mxu0 0.0
      %130 = vmatpush1.msra.mxu0 0.0
      %131 = vmatprep.subr.mxu0 0.0
      %132 = vmatpush1.msra.mxu0 0.0
      %133 = vmatprep.subr.mxu0 0.0
      %134 = vmatpush1.msra.mxu0 0.0
      %135 = vmatprep.subr.mxu0 0.0
      %136 = vmatpush1.msra.mxu0 0.0
      %137 = vmatprep.subr.mxu0 0.0
      %138 = vmatpush1.msra.mxu0 0.0
      %139 = vmatprep.subr.mxu0 0.0
      %140 = vmatpush1.msra.mxu0 0.0
      %141 = vmatprep.subr.mxu0 0.0
      %142 = vmatpush1.msra.mxu0 0.0
      %143 = vmatprep.subr.mxu0 0.0
      %144 = vmatpush1.msra.mxu0 0.0
      %145 = vmatprep.subr.mxu0 0.0
      %146 = vmatpush1.msra.mxu0 0.0
      %147 = vmatprep.subr.mxu0 0.0
      %148 = vmatpush1.msra.mxu0 0.0
      %149 = vmatprep.subr.mxu0 0.0
      %150 = vmatpush1.msra.mxu0 0.0
      %151 = vmatprep.subr.mxu0 0.0
      %152 = vmatpush1.msra.mxu0 0.0
      %153 = vmatprep.subr.mxu0 0.0
      %154 = vmatpush1.msra.mxu0 0.0
      %155 = vmatprep.subr.mxu0 0.0
      %156 = vmatpush1.msra.mxu0 0.0
      %157 = vmatprep.subr.mxu0 0.0
      %158 = vmatpush1.msra.mxu0 0.0
      %159 = vmatprep.subr.mxu0 0.0
      %160 = vmatpush1.msra.mxu0 0.0
      %161 = vmatprep.mubr.f32.mxu0 0.0
      %162 = vmatmul.mubr.f32.gmra.mrb[0].mxu0 %v72
      %v163 = vpop.f32.mrb[0].mxu0
      %v164 = vadd.f32 %v95, %v163
      %v165 = vpop.f32.mrb[0].mxu0
      %166 = vmatprep.mubr.f32.mxu0 0.0
      %167 = vmatmul.mubr.f32.gmra.mrb[0].mxu0 %v73
      %v168 = vpop.f32.mrb[0].mxu0
      %v169 = vadd.f32 %v95, %v168
      %v170 = vpop.f32.mrb[0].mxu0
      %171 = vdwg.mxu0
      %172 = vadd.xlane.f32.xlu0 %v164
      %v173 = vpop.xlane.xlu0 %172
      %174 = vadd.xlane.f32.xlu0 %v169
      %v175 = vpop.xlane.xlu0 %174
      %v176 = vmul.f32 %v164, %v164
      %v177 = vmul.f32 %v169, %v169
      %178 = vadd.xlane.f32.xlu0 %v176
      %v179 = vpop.xlane.xlu0 %178
      %180 = vadd.xlane.f32.xlu0 %v177
      %v181 = vpop.xlane.xlu0 %180
      %v182 = vmul.f32 %v173, 0.03125
      %v183 = vmul.f32 %v175, 0.03125
      %v184 = vmul.f32 %v179, 0.03125
      %v185 = vmul.f32 %v181, 0.03125
      %v186 = vmul.f32 %v182, %v182
      %v187 = vmul.f32 %v183, %v183
      %v188 = vsub.f32 %v184, %v186
      %v189 = vsub.f32 %v185, %v187
      %v190 = vmax.f32 %v188, 0.0
      %v191 = vmax.f32 %v189, 0.0
      %v192 = vsub.f32 %v164, %v182
      %v193 = vsub.f32 %v169, %v183
      %v194 = vadd.f32 %v190, 1e-12
      %v195 = vadd.f32 %v191, 1e-12
      %v196 = vrsqrt.pop %v194
      %v197 = vrsqrt.pop %v195
      %v198 = vmul.f32 %v192, %v196
      %v199 = vmul.f32 %v193, %v197
      %v200 = vld [vmem:[%s3] sm:$0x1]
      %v202 = vlaneseq
      %v203 = vshrl.u32 %v202, 7
      %v204 = vsub.s32 0, %v203
      %v205 = vrot.slane %v200, %v204
      %v207 = vmul.f32 %v198, %v205
      %v208 = vmul.f32 %v199, %v205
      %v209 = vld [vmem:[%s4] sm:$0x1]
      %v211 = vlaneseq
      %v212 = vshrl.u32 %v211, 7
      %v213 = vsub.s32 0, %v212
      %v214 = vrot.slane %v209, %v213
      %v216 = vadd.f32 %v207, %v214
      %v217 = vadd.f32 %v208, %v214
      %218 = vst [vmem:[#allocation2] sm:$0xff] %v216
      %219 = vst [vmem:[#allocation2 + $0x8] sm:$0xff] %v217
    $region45: #{tpu_custom_call.1} parent=1 // pred_fallthru
      _
    %v220 = vld [vmem:[#allocation2] sm:$0xff]
    %v221 = vld [vmem:[#allocation2 + $0x8] sm:$0xff]
    %v222 = vld [vmem:[#allocation8] sm:$0xff]
    %v223 = vld [vmem:[#allocation8 + $0x8] sm:$0xff]
    %v224 = vld [vmem:[#allocation8 + $0x10] sm:$0xff]
    %v225 = vld [vmem:[#allocation8 + $0x18] sm:$0xff]
    %v226 = vld [vmem:[#allocation8 + $0x20] sm:$0xff]
    %v227 = vld [vmem:[#allocation8 + $0x28] sm:$0xff]
    %v228 = vld [vmem:[#allocation8 + $0x30] sm:$0xff]
    %v229 = vld [vmem:[#allocation8 + $0x38] sm:$0xff]
    %v230 = vld [vmem:[#allocation8 + $0x40] sm:$0xff]
    %v231 = vld [vmem:[#allocation8 + $0x48] sm:$0xff]
    %v232 = vld [vmem:[#allocation8 + $0x50] sm:$0xff]
    %v233 = vld [vmem:[#allocation8 + $0x58] sm:$0xff]
    %v234 = vld [vmem:[#allocation8 + $0x60] sm:$0xff]
    %v235 = vld [vmem:[#allocation8 + $0x68] sm:$0xff]
    %v236 = vld [vmem:[#allocation8 + $0x70] sm:$0xff]
    %v237 = vld [vmem:[#allocation8 + $0x78] sm:$0xff]
    %v238 = vld [vmem:[%s6] sm:$0x1]
    %v240 = vlaneseq
    %v241 = vshrl.u32 %v240, 7
    %v242 = vsub.s32 0, %v241
    %v243 = vrot.slane %v238, %v242
    %245 = vmatprep.subr.mxu0 0.0
    %246 = vmatpush1.msra.mxu0 %v222
    %247 = vmatprep.subr.mxu0 0.0
    %248 = vmatpush1.msra.mxu0 %v223
    %249 = vmatprep.subr.mxu0 0.0
    %250 = vmatpush1.msra.mxu0 %v224
    %251 = vmatprep.subr.mxu0 0.0
    %252 = vmatpush1.msra.mxu0 %v225
    %253 = vmatprep.subr.mxu0 0.0
    %254 = vmatpush1.msra.mxu0 %v226
    %255 = vmatprep.subr.mxu0 0.0
    %256 = vmatpush1.msra.mxu0 %v227
    %257 = vmatprep.subr.mxu0 0.0
    %258 = vmatpush1.msra.mxu0 %v228
    %259 = vmatprep.subr.mxu0 0.0
    %260 = vmatpush1.msra.mxu0 %v229
    %261 = vmatprep.subr.mxu0 0.0
    %262 = vmatpush1.msra.mxu0 %v230
    %263 = vmatprep.subr.mxu0 0.0
    %264 = vmatpush1.msra.mxu0 %v231
    %265 = vmatprep.subr.mxu0 0.0
    %266 = vmatpush1.msra.mxu0 %v232
    %267 = vmatprep.subr.mxu0 0.0
    %268 = vmatpush1.msra.mxu0 %v233
    %269 = vmatprep.subr.mxu0 0.0
    %270 = vmatpush1.msra.mxu0 %v234
    %271 = vmatprep.subr.mxu0 0.0
    %272 = vmatpush1.msra.mxu0 %v235
    %273 = vmatprep.subr.mxu0 0.0
    %274 = vmatpush1.msra.mxu0 %v236
    %275 = vmatprep.subr.mxu0 0.0
    %276 = vmatpush1.msra.mxu0 %v237
    %277 = vmatprep.subr.mxu0 0.0
    %278 = vmatpush1.msra.mxu0 0.0
    %279 = vmatprep.subr.mxu0 0.0
    %280 = vmatpush1.msra.mxu0 0.0
    %281 = vmatprep.subr.mxu0 0.0
    %282 = vmatpush1.msra.mxu0 0.0
    %283 = vmatprep.subr.mxu0 0.0
    %284 = vmatpush1.msra.mxu0 0.0
    %285 = vmatprep.subr.mxu0 0.0
    %286 = vmatpush1.msra.mxu0 0.0
    %287 = vmatprep.subr.mxu0 0.0
    %288 = vmatpush1.msra.mxu0 0.0
    %289 = vmatprep.subr.mxu0 0.0
    %290 = vmatpush1.msra.mxu0 0.0
    %291 = vmatprep.subr.mxu0 0.0
    %292 = vmatpush1.msra.mxu0 0.0
    %293 = vmatprep.subr.mxu0 0.0
    %294 = vmatpush1.msra.mxu0 0.0
    %295 = vmatprep.subr.mxu0 0.0
    %296 = vmatpush1.msra.mxu0 0.0
    %297 = vmatprep.subr.mxu0 0.0
    %298 = vmatpush1.msra.mxu0 0.0
    %299 = vmatprep.subr.mxu0 0.0
    %300 = vmatpush1.msra.mxu0 0.0
    %301 = vmatprep.subr.mxu0 0.0
    %302 = vmatpush1.msra.mxu0 0.0
    %303 = vmatprep.subr.mxu0 0.0
    %304 = vmatpush1.msra.mxu0 0.0
    %305 = vmatprep.subr.mxu0 0.0
    %306 = vmatpush1.msra.mxu0 0.0
    %307 = vmatprep.subr.mxu0 0.0
    %308 = vmatpush1.msra.mxu0 0.0
    %309 = vmatprep.mubr.f32.mxu0 0.0
    %310 = vmatmul.mubr.f32.gmra.mrb[0].mxu0 %v220
    %v311 = vpop.f32.mrb[0].mxu0
    %v312 = vadd.f32 %v243, %v311
    %v313 = vpop.f32.mrb[0].mxu0
    %314 = vmatprep.mubr.f32.mxu0 0.0
    %315 = vmatmul.mubr.f32.gmra.mrb[0].mxu0 %v221
    %v316 = vpop.f32.mrb[0].mxu0
    %v317 = vadd.f32 %v243, %v316
    %v318 = vpop.f32.mrb[0].mxu0
    %319 = vdwg.mxu0
    %320 = vst [vmem:[#allocation9] sm:$0xff] %v312
    %321 = vst [vmem:[#allocation9 + $0x8] sm:$0xff] %v317
    // Predicated region
    $region46: #{tpu_custom_call.1} parent=1 // pred_check
      _
    $region47: #{tpu_custom_call.1} parent=1 // pred_check_branch
      %323 = sbr.rel (0) target = $region49
    $region48: #{tpu_custom_call.1} parent=1 // pred_region
      %s325 = ssub.s32 256, 256
      %326 = vsyncadd [#allocation5], %s325
      %s327 = sshll.u32 [#allocation9], 4
      %s328 = int_to_ptr.vmem [resolvable:$true] %s327
      %333 = dma.vmem_to_hbm [thread:$0]  %s328, 256, %s7, [#allocation5], 128, 128, 8
    $region49: #{tpu_custom_call.1} parent=1 // pred_fallthru
      _
    // Predicated region
    $region50: #{tpu_custom_call.1} parent=1 // pred_check
      _
    $region51: #{tpu_custom_call.1} parent=1 // pred_check_branch
      %335 = sbr.rel (0) target = $region53
    $region52: #{tpu_custom_call.1} parent=1 // pred_region
      %336 = dma.done [#allocation5], 256
    $region53: #{tpu_custom_call.1} parent=1 // pred_fallthru
      _
    %337 = vsyncpa [#allocation4], 1
    %338 = vsyncpa [#allocation7], 1
    %339 = vsyncpa [#allocation5], 1

</llo_original>
